<compile_context>
chip_gen: v6e
topology: v6e:2x2x1
jax: 0.10.0
libtpu: 0.0.40
codegen_flags: <defaults>
</compile_context>

<pallas_src>
import functools

import jax
import jax.numpy as jnp
from jax.experimental import pallas as pl
from jax.experimental.pallas import tpu as pltpu


def _round_up(x: int, m: int) -> int:
    return (x + m - 1) // m * m


def _cdiv(a: int, b: int) -> int:
    return (a + b - 1) // b


_VMEM_BUDGET = 24 * 1024 * 1024   # target double-buffered working set
_VMEM_LIMIT = 40 * 1024 * 1024    # explicit scoped-VMEM limit (all generations)


# --------------------------- kernels -----------------------------------------

def _linear2d_kernel(x_ref, w_ref, b_ref, o_ref):
    """Single-K-tile path: full contraction in one MXU pass, bias fused."""
    o_ref[...] = (
        jnp.dot(x_ref[...], w_ref[...], preferred_element_type=jnp.float32)
        + b_ref[...].astype(jnp.float32)
    ).astype(o_ref.dtype)


def _linear3d_kernel(x_ref, w_ref, b_ref, o_ref, acc_ref):
    """Split-K path: f32 VMEM accumulator across the last ('arbitrary') axis."""
    k = pl.program_id(2)

    @pl.when(k == 0)
    def _():
        acc_ref[...] = jnp.zeros_like(acc_ref)

    acc_ref[...] += jnp.dot(x_ref[...], w_ref[...],
                            preferred_element_type=jnp.float32)

    @pl.when(k == pl.num_programs(2) - 1)
    def _():
        o_ref[...] = (acc_ref[...] + b_ref[...].astype(jnp.float32)
                      ).astype(o_ref.dtype)


# --------------------------- tiling policy ------------------------------------

def _pick_tiles(M, nf, tw, itemsize, sublane):
    """Returns (TM, TK, TN, split_k)."""
    # Rows: never pad x.  Either a multiple-of-sublane tile (partial trailing
    # block is fine) or a full-dim block when M is small and unaligned.
    if M % sublane == 0 or M > 512:
        TM = min(512, _round_up(M, sublane))
    else:
        TM = M                                    # full-dim block, single i step

    def fits(tm, tk, tn, acc):
        f = 2 * (tm * tk + tk * tn + tm * tn + tn) * itemsize
        if acc:
            f += tm * tn * 4
        return f <= _VMEM_BUDGET

    # Preferred: single K tile AND single N tile -> x streamed from HBM once,
    # no accumulator, no padding anywhere.
    if fits(TM, nf, tw, acc=False):
        return TM, nf, tw, False

    # Single K tile, split the output dim into lane-dense 128-multiples.
    for tn in (512, 256, 128):
        if tn < tw and fits(TM, nf, tn, acc=False):
            return TM, nf, tn, False

    # Very large nf: split K (contraction dim gets zero-padded to a TK multiple).
    for tn in (tw, 512, 256, 128):
        for tk in (1024, 512, 256, 128):
            if fits(TM, tk, tn, acc=True):
                return TM, tk, tn, True

    # Last resort for extreme shapes.
    return max(sublane, 128), 512, 128, True


# --------------------------- wrapper ------------------------------------------

@functools.partial(jax.jit, static_argnames=("force_pallas",))
def flatten_head(x, weight, bias, *, force_pallas=False):
    """y = x @ weight.T + bias over the last dim of x (nn.Linear semantics).

    Args:
      x:      (..., nf)
      weight: (target_window, nf)   -- PyTorch nn.Linear convention
      bias:   (target_window,)
    Returns:
      (..., target_window)
    """
    nf = x.shape[-1]
    tw = weight.shape[0]
    lead = x.shape[:-1]
    M = 1
    for d in lead:
        M *= d

    # For genuinely tiny problems the per-call/per-step overhead dominates;
    # let XLA fuse the matmul instead.
    if not force_pallas and (M * nf * tw) < (1 << 18):
        return x @ weight.T + bias

    dtype = x.dtype
    itemsize = jnp.dtype(dtype).itemsize
    sublane = max(8, 32 // itemsize)              # 8 f32 / 16 bf16 / 32 int8

    x2d = x.reshape(M, nf)
    w_t = weight.T                                # (nf, tw): one small transpose
    b2d = bias.reshape(1, tw)

    TM, TK, TN, split_k = _pick_tiles(M, nf, tw, itemsize, sublane)

    grid_i = _cdiv(M, TM)
    grid_j = _cdiv(tw, TN)

    # v7x has 2 TensorCores: ensure at least one 'parallel' axis has >= 2
    # iterations when the problem size allows it.
    if grid_i * grid_j < 2 and M >= 2 * sublane:
        TM = _round_up(_cdiv(M, 2), sublane)
        grid_i = _cdiv(M, TM)

    if split_k:
        # The contraction dim must be fully covered by TK blocks; zero padding
        # keeps the reduction exact.  Only hit for very large nf.
        nf_pad = _round_up(nf, TK)
        if nf_pad != nf:
            x2d = jnp.pad(x2d, ((0, 0), (0, nf_pad - nf)))
            w_t = jnp.pad(w_t, ((0, nf_pad - nf), (0, 0)))
        grid_k = nf_pad // TK
    else:
        grid_k = 1

    cost = pl.CostEstimate(
        flops=2 * M * nf * tw,
        transcendentals=0,
        bytes_accessed=(x2d.size * itemsize * grid_j     # x re-read per N tile
                        + w_t.size * itemsize * grid_i   # W re-read per M tile
                        + b2d.size * itemsize
                        + M * tw * itemsize),
    )

    out_shape = jax.ShapeDtypeStruct((M, tw), dtype)

    if split_k:
        grid = (grid_i, grid_j, grid_k)
        in_specs = [
            pl.BlockSpec((TM, TK), lambda i, j, k: (i, k)),    # x tile
            pl.BlockSpec((TK, TN), lambda i, j, k: (k, j)),    # W.T tile
            pl.BlockSpec((1, TN), lambda i, j, k: (0, j)),     # bias tile
        ]
        out_specs = pl.BlockSpec((TM, TN), lambda i, j, k: (i, j))
        scratch = [pltpu.VMEM((TM, TN), jnp.float32)]
        kernel = _linear3d_kernel
        dims = ("parallel", "parallel", "arbitrary")
    else:
        grid = (grid_i, grid_j)
        in_specs = [
            pl.BlockSpec((TM, TK), lambda i, j: (i, 0)),       # x tile
            pl.BlockSpec((TK, TN), lambda i, j: (0, j)),       # W.T tile
            pl.BlockSpec((1, TN), lambda i, j: (0, j)),        # bias tile
        ]
        out_specs = pl.BlockSpec((TM, TN), lambda i, j: (i, j))
        scratch = []
        kernel = _linear2d_kernel
        dims = ("parallel", "parallel")

    out = pl.pallas_call(
        kernel,
        out_shape=out_shape,
        grid_spec=pltpu.PrefetchScalarGridSpec(
            num_scalar_prefetch=0,
            grid=grid,
            in_specs=in_specs,
            out_specs=out_specs,
            scratch_shapes=scratch,
        ),
        compiler_params=pltpu.CompilerParams(
            dimension_semantics=dims,
            vmem_limit_bytes=_VMEM_LIMIT),
        cost_estimate=cost,
    )(x2d, w_t, b2d)

    return out.reshape(*lead, tw)


if __name__ == "__main__":
    key = jax.random.PRNGKey(0)
    kx, kw, kb, kx2, kw2, kb2 = jax.random.split(key, 6)

    # Small shapes consistent with FlattenHead usage: x is (batch, n_vars, nf).
    batch, n_vars, nf, target_window = 2, 4, 64, 24
    x = jax.random.normal(kx, (batch, n_vars, nf), dtype=jnp.float32)
    bound = 1.0 / (nf ** 0.5)   # mimic nn.Linear's uniform init range
    weight = jax.random.uniform(kw, (target_window, nf), jnp.float32,
                                minval=-bound, maxval=bound)
    bias = jax.random.uniform(kb, (target_window,), jnp.float32,
                              minval=-bound, maxval=bound)

    # force_pallas=True so the demo exercises the Pallas kernel even at small M.
    y = jax.block_until_ready(flatten_head(x, weight, bias, force_pallas=True))
    y_ref = x @ weight.T + bias
    assert y.shape == (batch, n_vars, target_window)
    assert jnp.allclose(y, y_ref, atol=1e-5, rtol=1e-5)

    # Second, non-128-aligned shape to exercise masked tail stores (tw > 128,
    # nf not a multiple of 128) on the same single-K/single-N fast path.
    b2_, v2_, nf2, tw2 = 2, 4, 96, 136
    x2 = jax.random.normal(kx2, (b2_, v2_, nf2), dtype=jnp.float32)
    bound2 = 1.0 / (nf2 ** 0.5)
    w2 = jax.random.uniform(kw2, (tw2, nf2), jnp.float32,
                            minval=-bound2, maxval=bound2)
    bz2 = jax.random.uniform(kb2, (tw2,), jnp.float32,
                             minval=-bound2, maxval=bound2)
    y2 = jax.block_until_ready(flatten_head(x2, w2, bz2, force_pallas=True))
    assert jnp.allclose(y2, x2 @ w2.T + bz2, atol=1e-5, rtol=1e-5)

    print("KERNEL_OK")
</pallas_src>

<mosaic_0001>
module attributes {stable_mosaic.version = 11 : i64} {
  func.func @_linear2d_kernel(%arg0: i32, %arg1: i32, %arg2: memref<8x64xf32, #tpu.memory_space<vmem>>, %arg3: memref<64x24xf32, #tpu.memory_space<vmem>>, %arg4: memref<1x24xf32, #tpu.memory_space<vmem>>, %arg5: memref<8x24xf32, #tpu.memory_space<vmem>>) attributes {dimension_semantics = [#tpu.dimension_semantics<parallel>, #tpu.dimension_semantics<parallel>], iteration_bounds = array<i64: 1, 1>, scalar_prefetch = 0 : i64, scratch_operands = 0 : i64, tpu.core_type = #tpu.core_type<tc>, window_params = [{transform_indices = @transform_0, window_bounds = array<i64: 8, 64>}, {transform_indices = @transform_1, window_bounds = array<i64: 64, 24>}, {transform_indices = @transform_2, window_bounds = array<i64: 1, 24>}, {transform_indices = @transform_3, window_bounds = array<i64: 8, 24>}]} {
    %c0 = arith.constant 0 : index
    %c0_0 = arith.constant 0 : index
    %0 = vector.load %arg2[%c0, %c0_0] : memref<8x64xf32, #tpu.memory_space<vmem>>, vector<8x64xf32>
    %c0_1 = arith.constant 0 : index
    %c0_2 = arith.constant 0 : index
    %1 = vector.load %arg3[%c0_1, %c0_2] : memref<64x24xf32, #tpu.memory_space<vmem>>, vector<64x24xf32>
    %cst = arith.constant dense<0.000000e+00> : vector<8x24xf32>
    %2 = tpu.matmul %0, %1, %cst {dimension_numbers = #tpu.dot_dimension_numbers<[1], [0], [0], [1], [0, 0, 1, 1], [], []>} : vector<8x64xf32>, vector<64x24xf32>, vector<8x24xf32> -> vector<8x24xf32>
    %c0_3 = arith.constant 0 : index
    %c0_4 = arith.constant 0 : index
    %3 = vector.load %arg4[%c0_3, %c0_4] : memref<1x24xf32, #tpu.memory_space<vmem>>, vector<1x24xf32>
    %4 = vector.broadcast %3 : vector<1x24xf32> to vector<8x24xf32>
    %5 = arith.addf %2, %4 : vector<8x24xf32>
    %c0_5 = arith.constant 0 : index
    %c0_6 = arith.constant 0 : index
    %6 = vector.load %arg5[%c0_5, %c0_6] : memref<8x24xf32, #tpu.memory_space<vmem>>, vector<8x24xf32>
    tpu.vector_store %arg5[%c0_5, %c0_6], %5 {strides = array<i32>} : memref<8x24xf32, #tpu.memory_space<vmem>>, vector<8x24xf32>,
    return
  }
  func.func @transform_0(%arg0: i32, %arg1: i32) -> (i32, i32) {
    %c0_i32 = arith.constant 0 : i32
    %c0_i32_0 = arith.constant 0 : i32
    return %arg0, %c0_i32 : i32, i32
  }
  func.func @transform_1(%arg0: i32, %arg1: i32) -> (i32, i32) {
    %c0_i32 = arith.constant 0 : i32
    %c0_i32_0 = arith.constant 0 : i32
    return %c0_i32, %arg1 : i32, i32
  }
  func.func @transform_2(%arg0: i32, %arg1: i32) -> (i32, i32) {
    %c0_i32 = arith.constant 0 : i32
    %c0_i32_0 = arith.constant 0 : i32
    return %c0_i32, %arg1 : i32, i32
  }
  func.func @transform_3(%arg0: i32, %arg1: i32) -> (i32, i32) {
    %c0_i32 = arith.constant 0 : i32
    return %arg0, %arg1 : i32, i32
  }
}

</mosaic_0001>

<llo_original>
// kernel: flatten_head.1
$region0: #{flatten_head.1}
  #allocation0 [shape = 'u32[]', space=smem, size = 0x4, offset = 0x4, fixed_abs, tag = 'smem constant byte address 0x4 - core index']
  #allocation1 [shape = 'u32[144,128]{1,0:T(1,128)}', space=vmem, size = 0x12000, scoped, tag = 'internal scratch']
  %s0 = inlined_call_operand.vmem [shape: f32[8,64], index: 0, kind: input, shape index: {}]
  %s1 = inlined_call_operand.vmem [shape: f32[64,24], index: 1, kind: input, shape index: {}]
  %s2 = inlined_call_operand.vmem [shape: f32[1,24], index: 2, kind: input, shape index: {}]
  %s3 = inlined_call_operand.hbm [shape: f32[8,24], index: 3, kind: output, shape index: {}]
  %s4 = sld [smem:[#allocation0]]
  $region22: #{flatten_head.1} parent=0
    _
  %s6 = ssub.s32 1, %s4
  %s7 = scalar_select 0, %s6, %s4
  $region1: #{flatten_head.1} parent=0
    #allocation2 [shape = 'u8[4096]{0}', space=vmem, size = 0x1000, scoped, tag = 'output window, operand 0, single buffered']
    #allocation3 [shape = 's32[1]{0}', space=sflag, size = 0x4, scoped, tag = 'scoped memory for flatten_head.1']
    %8 = vsyncpa [#allocation3], 0
    // Predicated region
    $region2: #{flatten_head.1} parent=1 // pred_check
      _
    $region3: #{flatten_head.1} parent=1 // pred_check_branch
      %10 = sbr.rel (0) target = $region5
    $region4: #{flatten_head.1} parent=1 // pred_region
      _
    $region5: #{flatten_head.1} parent=1 // pred_fallthru
      _
    // Predicated region
    $region6: #{flatten_head.1} parent=1 // pred_check
      _
    $region7: #{flatten_head.1} parent=1 // pred_check_branch
      %12 = sbr.rel (0) target = $region9
    $region8: #{flatten_head.1} parent=1 // pred_region
      _
    $region9: #{flatten_head.1} parent=1 // pred_fallthru
      _
    // Predicated region
    $region10: #{flatten_head.1} parent=1 // pred_check
      _
    $region11: #{flatten_head.1} parent=1 // pred_check_branch
      %14 = sbr.rel (0) target = $region13
    $region12: #{flatten_head.1} parent=1 // pred_region
      _
    $region13: #{flatten_head.1} parent=1 // pred_fallthru
      _
    %v15 = vld [vmem:[%s0] sm:$0xff]
    %v16 = vld [vmem:[%s1] sm:$0xff]
    %v17 = vld [vmem:[%s1 + $0x8] sm:$0xff]
    %v18 = vld [vmem:[%s1 + $0x10] sm:$0xff]
    %v19 = vld [vmem:[%s1 + $0x18] sm:$0xff]
    %v20 = vld [vmem:[%s1 + $0x20] sm:$0xff]
    %v21 = vld [vmem:[%s1 + $0x28] sm:$0xff]
    %v22 = vld [vmem:[%s1 + $0x30] sm:$0xff]
    %v23 = vld [vmem:[%s1 + $0x38] sm:$0xff]
    %v24 = vld [vmem:[%s2] sm:$0x1]
    %v26 = vlaneseq
    %v27 = vshrl.u32 %v26, 7
    %v28 = vsub.s32 0, %v27
    %v29 = vrot.slane %v24, %v28
    %vm31 = vcmask 523264
    %v33 = vsel %vm31, %v15, 0
    %35 = vmatprep.subr.mxu0 0.0
    %36 = vmatpush1.msra.mxu0 0.0
    %37 = vmatprep.subr.mxu0 0.0
    %38 = vmatpush1.msra.mxu0 0.0
    %39 = vmatprep.subr.mxu0 0.0
    %40 = vmatpush1.msra.mxu0 0.0
    %41 = vmatprep.subr.mxu0 0.0
    %42 = vmatpush1.msra.mxu0 0.0
    %43 = vmatprep.subr.mxu0 0.0
    %44 = vmatpush1.msra.mxu0 0.0
    %45 = vmatprep.subr.mxu0 0.0
    %46 = vmatpush1.msra.mxu0 0.0
    %47 = vmatprep.subr.mxu0 0.0
    %48 = vmatpush1.msra.mxu0 0.0
    %49 = vmatprep.subr.mxu0 0.0
    %50 = vmatpush1.msra.mxu0 0.0
    %51 = vmatprep.subr.mxu0 0.0
    %52 = vmatpush1.msra.mxu0 %v23
    %53 = vmatprep.subr.mxu0 0.0
    %54 = vmatpush1.msra.mxu0 %v22
    %55 = vmatprep.subr.mxu0 0.0
    %56 = vmatpush1.msra.mxu0 %v21
    %57 = vmatprep.subr.mxu0 0.0
    %58 = vmatpush1.msra.mxu0 %v20
    %59 = vmatprep.subr.mxu0 0.0
    %60 = vmatpush1.msra.mxu0 %v19
    %61 = vmatprep.subr.mxu0 0.0
    %62 = vmatpush1.msra.mxu0 %v18
    %63 = vmatprep.subr.mxu0 0.0
    %64 = vmatpush1.msra.mxu0 %v17
    %65 = vmatprep.subr.mxu0 0.0
    %66 = vmatpush1.msra.mxu0 %v16
    %67 = vmatprep.subr.mxu0 0.0
    %68 = vmatpush2.msra.mxu0 0.0
    %69 = vmatprep.subr.mxu0 0.0
    %70 = vmatpush2.msra.mxu0 0.0
    %71 = vmatprep.subr.mxu0 0.0
    %72 = vmatpush2.msra.mxu0 0.0
    %73 = vmatprep.subr.mxu0 0.0
    %74 = vmatpush2.msra.mxu0 0.0
    %75 = vmatprep.subr.mxu0 0.0
    %76 = vmatpush2.msra.mxu0 0.0
    %77 = vmatprep.subr.mxu0 0.0
    %78 = vmatpush2.msra.mxu0 0.0
    %79 = vmatprep.subr.mxu0 0.0
    %80 = vmatpush2.msra.mxu0 0.0
    %81 = vmatprep.subr.mxu0 0.0
    %82 = vmatpush2.msra.mxu0 0.0
    %83 = vmatprep.subr.mxu0 0.0
    %84 = vmatpush2.msra.mxu0 0.0
    %85 = vmatprep.subr.mxu0 0.0
    %86 = vmatpush2.msra.mxu0 0.0
    %87 = vmatprep.subr.mxu0 0.0
    %88 = vmatpush2.msra.mxu0 0.0
    %89 = vmatprep.subr.mxu0 0.0
    %90 = vmatpush2.msra.mxu0 0.0
    %91 = vmatprep.subr.mxu0 0.0
    %92 = vmatpush2.msra.mxu0 0.0
    %93 = vmatprep.subr.mxu0 0.0
    %94 = vmatpush2.msra.mxu0 0.0
    %95 = vmatprep.subr.mxu0 0.0
    %96 = vmatpush2.msra.mxu0 0.0
    %97 = vmatprep.subr.mxu0 0.0
    %98 = vmatpush2.msra.mxu0 0.0
    %99 = vmatprep.mubr.f32.mxu0 0.0
    %100 = vmatmul.mubr.f32.gmra.mxu0 %v33
    %v101 = vpop.f32.mrf.mxu0
    %v102 = vadd.f32 %v29, %v101
    %v103 = vpop.f32.mrf.mxu0
    %104 = vdwg.mxu0
    %vm105 = vcmask 195584
    %106 = vst.msk [vmem:[#allocation2] sm:$0xff] %vm105, %v102
    // Predicated region
    $region14: #{flatten_head.1} parent=1 // pred_check
      _
    $region15: #{flatten_head.1} parent=1 // pred_check_branch
      %108 = sbr.rel (0) target = $region17
    $region16: #{flatten_head.1} parent=1 // pred_region
      %s110 = ssub.s32 128, 128
      %111 = vsyncadd [#allocation3], %s110
      %s113 = sshll.u32 [#allocation2], 4
      %s114 = int_to_ptr.vmem [resolvable:$true] %s113
      %116 = dma.vmem_to_hbm [thread:$0]  %s114, 128, %s3, [#allocation3]
    $region17: #{flatten_head.1} parent=1 // pred_fallthru
      _
    // Predicated region
    $region18: #{flatten_head.1} parent=1 // pred_check
      _
    $region19: #{flatten_head.1} parent=1 // pred_check_branch
      %118 = sbr.rel (0) target = $region21
    $region20: #{flatten_head.1} parent=1 // pred_region
      %119 = dma.done [#allocation3], 128
    $region21: #{flatten_head.1} parent=1 // pred_fallthru
      _
    %120 = vsyncpa [#allocation3], 1

</llo_original>
